<compile_context>
chip_gen: v7x
topology: tpu7x:2x2x1
jax: 0.10.0
libtpu: 0.0.40
codegen_flags: <defaults>
</compile_context>

<pallas_src>
import functools

import jax
import jax.numpy as jnp
from jax.experimental import pallas as pl
from jax.experimental.pallas import tpu as pltpu


N_IN = 16
H1, H2, H3 = 256, 64, 64
N_OUT = 3
OUT_PAD = 8            # narrow padded output width (3 real logits + 5 zeros)
DEFAULT_TILE_B = 1024  # per-step overhead amortized; VMEM use stays tiny


def _round_up(x, m):
    return (x + m - 1) // m * m


def mlp_kernel(x_ref, w1_ref, b1_ref, w2_ref, b2_ref,
               w3_ref, b3_ref, w4_ref, b4_ref, o_ref,
               *, n_sub, sub_rows, use_bf16_act):
    # Hoist weight / bias loads out of the sub-chunk loop (loaded once per tile).
    w1 = w1_ref[...]
    w2 = w2_ref[...]
    w3 = w3_ref[...]
    w4 = w4_ref[...]
    b1 = b1_ref[...]
    b2 = b2_ref[...]
    b3 = b3_ref[...]
    b4 = b4_ref[...]

    act_dtype = jnp.bfloat16 if use_bf16_act else jnp.float32

    # Independent sub-chunks of the batch tile: lets the scheduler overlap one
    # sub-chunk's MXU matmul with another's tanh (EUP) / bias add (VPU).
    for c in range(n_sub):
        r0 = c * sub_rows
        x = x_ref[pl.ds(r0, sub_rows), :].astype(jnp.bfloat16)
        # Layer 1: Linear(16, 256) + Tanh
        h = jnp.dot(x, w1, preferred_element_type=jnp.float32)
        h = jnp.tanh((h + b1).astype(act_dtype))
        # Layer 2: Linear(256, 64) + Tanh
        h = jnp.dot(h.astype(jnp.bfloat16), w2, preferred_element_type=jnp.float32)
        h = jnp.tanh((h + b2).astype(act_dtype))
        # Layer 3: Linear(64, 64) + Tanh
        h = jnp.dot(h.astype(jnp.bfloat16), w3, preferred_element_type=jnp.float32)
        h = jnp.tanh((h + b3).astype(act_dtype))
        # Layer 4: Linear(64, 8-padded)  (only first 3 columns are real logits)
        h = jnp.dot(h.astype(jnp.bfloat16), w4, preferred_element_type=jnp.float32)
        o_ref[pl.ds(r0, sub_rows), :] = (h + b4).astype(o_ref.dtype)


def default_use_bf16_act():
    """bf16 elementwise (tanh/bias) only on chips with a bf16 VPU/EUP path."""
    try:
        kind = jax.devices()[0].device_kind.lower()
    except Exception:
        return False
    return "v5" not in kind


@functools.partial(jax.jit, static_argnames=("tile_b", "use_bf16_act"))
def nn_classifier_forward(x, prepared_params, tile_b=DEFAULT_TILE_B,
                          use_bf16_act=True):
    """x: (B, 16) float32 -> (B, 3) float32 logits.

    `prepared_params` comes from prepare_params() (bf16 weights, padded L4).
    """
    w1b, b1, w2b, b2, w3b, b3, w4b, b4p = prepared_params
    B, F = x.shape
    assert F == N_IN

    # --- batch tiling / padding --------------------------------------------
    tb = min(tile_b, _round_up(B, 8))          # sublane-aligned tile
    # Megacore-friendliness (v7x has 2 TCs): avoid a 1-step grid when we can
    # split cleanly into two tiles.
    if _round_up(B, tb) == tb and tb >= 256 and tb % 16 == 0:
        tb //= 2
    b_pad = _round_up(B, tb)
    if b_pad != B:
        x = jnp.pad(x, ((0, b_pad - B), (0, 0)))
    grid = (b_pad // tb,)

    # Sub-chunking inside the kernel: largest of {4, 2, 1} that keeps
    # sub-chunks sublane-aligned and >=128 rows.
    n_sub = 1
    for cand in (4, 2):
        if tb % (8 * cand) == 0 and tb // cand >= 128:
            n_sub = cand
            break
    sub_rows = tb // n_sub

    # --- cost hint for XLA scheduling ---------------------------------------
    flops = 2 * b_pad * (N_IN * H1 + H1 * H2 + H2 * H3 + H3 * OUT_PAD)
    transcendentals = b_pad * (H1 + H2 + H3)
    bytes_accessed = (
        b_pad * N_IN * 4                                            # x in (f32)
        + (N_IN * H1 + H1 * H2 + H2 * H3 + H3 * OUT_PAD) * 2        # bf16 weights
        + (H1 + H2 + H3 + OUT_PAD) * 4                              # f32 biases
        + b_pad * OUT_PAD * 4                                       # out (f32)
    )

    const = lambda shape: pl.BlockSpec(shape, lambda i: (0, 0))

    kernel = functools.partial(mlp_kernel, n_sub=n_sub, sub_rows=sub_rows,
                               use_bf16_act=use_bf16_act)

    out = pl.pallas_call(
        kernel,
        out_shape=jax.ShapeDtypeStruct((b_pad, OUT_PAD), jnp.float32),
        grid_spec=pltpu.PrefetchScalarGridSpec(
            num_scalar_prefetch=0,
            grid=grid,
            in_specs=[
                pl.BlockSpec((tb, N_IN), lambda i: (i, 0)),   # x tile (streamed)
                const((N_IN, H1)), const((1, H1)),            # layer 1 (resident)
                const((H1, H2)), const((1, H2)),              # layer 2
                const((H2, H3)), const((1, H3)),              # layer 3
                const((H3, OUT_PAD)), const((1, OUT_PAD)),    # layer 4 (padded)
            ],
            out_specs=pl.BlockSpec((tb, OUT_PAD), lambda i: (i, 0)),
        ),
        compiler_params=pltpu.CompilerParams(
            dimension_semantics=("parallel",),   # megacore on v7x; no-op on v5e/v6e
        ),
        cost_estimate=pl.CostEstimate(
            flops=flops,
            transcendentals=transcendentals,
            bytes_accessed=bytes_accessed,
        ),
    )(x, w1b, b1, w2b, b2, w3b, b3, w4b, b4p)

    return out[:B, :N_OUT]


# ---------------------------------------------------------------------------
# Params / references
# ---------------------------------------------------------------------------
def init_linear(key, fan_in, fan_out):
    """PyTorch-style init: U(-1/sqrt(fan_in), 1/sqrt(fan_in)).
    Weight stored as (fan_in, fan_out) (already transposed for x @ W)."""
    kw, kb = jax.random.split(key)
    bound = 1.0 / jnp.sqrt(jnp.float32(fan_in))
    w = jax.random.uniform(kw, (fan_in, fan_out), jnp.float32, -bound, bound)
    b = jax.random.uniform(kb, (1, fan_out), jnp.float32, -bound, bound)
    return w, b


def make_params(key, n_inputs=N_IN):
    k1, k2, k3, k4 = jax.random.split(key, 4)
    return (
        init_linear(k1, n_inputs, H1),
        init_linear(k2, H1, H2),
        init_linear(k3, H2, H3),
        init_linear(k4, H3, N_OUT),
    )


def prepare_params(params):
    """One-time (model-load-time) prep: bf16 weight casts + layer-4 padding.

    Keeping this out of the jitted forward removes ~8 small XLA ops from every
    serving call."""
    (w1, b1), (w2, b2), (w3, b3), (w4, b4) = params
    w4p = jnp.zeros((H3, OUT_PAD), jnp.float32).at[:, :N_OUT].set(w4)
    b4p = jnp.zeros((1, OUT_PAD), jnp.float32).at[:, :N_OUT].set(b4)
    return (
        w1.astype(jnp.bfloat16), b1.astype(jnp.float32),
        w2.astype(jnp.bfloat16), b2.astype(jnp.float32),
        w3.astype(jnp.bfloat16), b3.astype(jnp.float32),
        w4p.astype(jnp.bfloat16), b4p,
    )


def reference_forward_f32(x, params):
    (w1, b1), (w2, b2), (w3, b3), (w4, b4) = params
    h = jnp.tanh(x @ w1 + b1)
    h = jnp.tanh(h @ w2 + b2)
    h = jnp.tanh(h @ w3 + b3)
    return h @ w4 + b4


def reference_forward_matched(x, params, use_bf16_act):
    """Reference mirroring the kernel's bf16-operand / f32-accumulate recipe."""
    (w1, b1), (w2, b2), (w3, b3), (w4, b4) = params
    bf = jnp.bfloat16
    act = bf if use_bf16_act else jnp.float32
    d = lambda a, w: jnp.dot(a.astype(bf), w.astype(bf),
                             preferred_element_type=jnp.float32)
    h = jnp.tanh((d(x, w1) + b1).astype(act))
    h = jnp.tanh((d(h, w2) + b2).astype(act))
    h = jnp.tanh((d(h, w3) + b3).astype(act))
    return d(h, w4) + b4


if __name__ == "__main__":
    key = jax.random.PRNGKey(0)
    kx, kp = jax.random.split(key)
    params = make_params(kp, N_IN)
    prepped = prepare_params(params)
    use_bf16_act = default_use_bf16_act()

    # --- small-shape check (single tile, n_sub == 1) -------------------------
    batch = 8
    x = jax.random.normal(kx, (batch, N_IN), jnp.float32)
    out = nn_classifier_forward(x, prepped, use_bf16_act=use_bf16_act)
    out = jax.block_until_ready(out)
    assert out.shape == (batch, N_OUT)

    ref_m = reference_forward_matched(x, params, use_bf16_act)
    ref_f = reference_forward_f32(x, params)
    assert jnp.allclose(out, ref_m, atol=1e-2, rtol=1e-2), \
        "mismatch vs precision-matched JAX reference"
    assert jnp.allclose(out, ref_f, atol=6e-2, rtol=6e-2), \
        "mismatch vs f32 JAX reference (sanity)"

    # --- larger batch: exercises padding, multi-step grid, sub-chunking ------
    batch2 = 600
    x2 = jax.random.normal(jax.random.PRNGKey(1), (batch2, N_IN), jnp.float32)
    out2 = jax.block_until_ready(
        nn_classifier_forward(x2, prepped, use_bf16_act=use_bf16_act))
    assert out2.shape == (batch2, N_OUT)
    ref2 = reference_forward_matched(x2, params, use_bf16_act)
    assert jnp.allclose(out2, ref2, atol=1e-2, rtol=1e-2), \
        "mismatch vs precision-matched JAX reference (large batch)"

    print("KERNEL_OK")
</pallas_src>

<mosaic_0001>
module attributes {stable_mosaic.version = 11 : i64} {
  func.func @mlp_kernel(%arg0: i32, %arg1: memref<8x16xf32, #tpu.memory_space<vmem>>, %arg2: memref<16x256xbf16, #tpu.memory_space<vmem>>, %arg3: memref<1x256xf32, #tpu.memory_space<vmem>>, %arg4: memref<256x64xbf16, #tpu.memory_space<vmem>>, %arg5: memref<1x64xf32, #tpu.memory_space<vmem>>, %arg6: memref<64x64xbf16, #tpu.memory_space<vmem>>, %arg7: memref<1x64xf32, #tpu.memory_space<vmem>>, %arg8: memref<64x8xbf16, #tpu.memory_space<vmem>>, %arg9: memref<1x8xf32, #tpu.memory_space<vmem>>, %arg10: memref<8x8xf32, #tpu.memory_space<vmem>>) attributes {dimension_semantics = [#tpu.dimension_semantics<parallel>], iteration_bounds = array<i64: 1>, scalar_prefetch = 0 : i64, scratch_operands = 0 : i64, tpu.core_type = #tpu.core_type<tc>, window_params = [{transform_indices = @transform_0, window_bounds = array<i64: 8, 16>}, {pipeline_mode = #tpu.pipeline_mode<synchronous>, transform_indices = @transform_1, window_bounds = array<i64: 16, 256>}, {pipeline_mode = #tpu.pipeline_mode<synchronous>, transform_indices = @transform_2, window_bounds = array<i64: 1, 256>}, {pipeline_mode = #tpu.pipeline_mode<synchronous>, transform_indices = @transform_3, window_bounds = array<i64: 256, 64>}, {pipeline_mode = #tpu.pipeline_mode<synchronous>, transform_indices = @transform_4, window_bounds = array<i64: 1, 64>}, {pipeline_mode = #tpu.pipeline_mode<synchronous>, transform_indices = @transform_5, window_bounds = array<i64: 64, 64>}, {pipeline_mode = #tpu.pipeline_mode<synchronous>, transform_indices = @transform_6, window_bounds = array<i64: 1, 64>}, {pipeline_mode = #tpu.pipeline_mode<synchronous>, transform_indices = @transform_7, window_bounds = array<i64: 64, 8>}, {pipeline_mode = #tpu.pipeline_mode<synchronous>, transform_indices = @transform_8, window_bounds = array<i64: 1, 8>}, {transform_indices = @transform_9, window_bounds = array<i64: 8, 8>}]} {
    %c0 = arith.constant 0 : index
    %c0_0 = arith.constant 0 : index
    %0 = vector.load %arg2[%c0, %c0_0] : memref<16x256xbf16, #tpu.memory_space<vmem>>, vector<16x256xbf16>
    %c0_1 = arith.constant 0 : index
    %c0_2 = arith.constant 0 : index
    %1 = vector.load %arg4[%c0_1, %c0_2] : memref<256x64xbf16, #tpu.memory_space<vmem>>, vector<256x64xbf16>
    %c0_3 = arith.constant 0 : index
    %c0_4 = arith.constant 0 : index
    %2 = vector.load %arg6[%c0_3, %c0_4] : memref<64x64xbf16, #tpu.memory_space<vmem>>, vector<64x64xbf16>
    %c0_5 = arith.constant 0 : index
    %c0_6 = arith.constant 0 : index
    %3 = vector.load %arg8[%c0_5, %c0_6] : memref<64x8xbf16, #tpu.memory_space<vmem>>, vector<64x8xbf16>
    %c0_7 = arith.constant 0 : index
    %c0_8 = arith.constant 0 : index
    %4 = vector.load %arg3[%c0_7, %c0_8] : memref<1x256xf32, #tpu.memory_space<vmem>>, vector<1x256xf32>
    %c0_9 = arith.constant 0 : index
    %c0_10 = arith.constant 0 : index
    %5 = vector.load %arg5[%c0_9, %c0_10] : memref<1x64xf32, #tpu.memory_space<vmem>>, vector<1x64xf32>
    %c0_11 = arith.constant 0 : index
    %c0_12 = arith.constant 0 : index
    %6 = vector.load %arg7[%c0_11, %c0_12] : memref<1x64xf32, #tpu.memory_space<vmem>>, vector<1x64xf32>
    %c0_13 = arith.constant 0 : index
    %c0_14 = arith.constant 0 : index
    %7 = vector.load %arg9[%c0_13, %c0_14] : memref<1x8xf32, #tpu.memory_space<vmem>>, vector<1x8xf32>
    %c0_15 = arith.constant 0 : index
    %c0_16 = arith.constant 0 : index
    %8 = vector.load %arg1[%c0_15, %c0_16] : memref<8x16xf32, #tpu.memory_space<vmem>>, vector<8x16xf32>
    %9 = arith.truncf %8 : vector<8x16xf32> to vector<8x16xbf16>
    %cst = arith.constant dense<0.000000e+00> : vector<8x256xf32>
    %10 = tpu.matmul %9, %0, %cst {dimension_numbers = #tpu.dot_dimension_numbers<[1], [0], [0], [1], [0, 0, 1, 1], [], []>} : vector<8x16xbf16>, vector<16x256xbf16>, vector<8x256xf32> -> vector<8x256xf32>
    %11 = vector.broadcast %4 : vector<1x256xf32> to vector<8x256xf32>
    %12 = arith.addf %10, %11 : vector<8x256xf32>
    %13 = arith.truncf %12 : vector<8x256xf32> to vector<8x256xbf16>
    %14 = math.tanh %13 : vector<8x256xbf16>
    %cst_17 = arith.constant dense<0.000000e+00> : vector<8x64xf32>
    %15 = tpu.matmul %14, %1, %cst_17 {dimension_numbers = #tpu.dot_dimension_numbers<[1], [0], [0], [1], [0, 0, 1, 1], [], []>} : vector<8x256xbf16>, vector<256x64xbf16>, vector<8x64xf32> -> vector<8x64xf32>
    %16 = vector.broadcast %5 : vector<1x64xf32> to vector<8x64xf32>
    %17 = arith.addf %15, %16 : vector<8x64xf32>
    %18 = arith.truncf %17 : vector<8x64xf32> to vector<8x64xbf16>
    %19 = math.tanh %18 : vector<8x64xbf16>
    %cst_18 = arith.constant dense<0.000000e+00> : vector<8x64xf32>
    %20 = tpu.matmul %19, %2, %cst_18 {dimension_numbers = #tpu.dot_dimension_numbers<[1], [0], [0], [1], [0, 0, 1, 1], [], []>} : vector<8x64xbf16>, vector<64x64xbf16>, vector<8x64xf32> -> vector<8x64xf32>
    %21 = vector.broadcast %6 : vector<1x64xf32> to vector<8x64xf32>
    %22 = arith.addf %20, %21 : vector<8x64xf32>
    %23 = arith.truncf %22 : vector<8x64xf32> to vector<8x64xbf16>
    %24 = math.tanh %23 : vector<8x64xbf16>
    %cst_19 = arith.constant dense<0.000000e+00> : vector<8x8xf32>
    %25 = tpu.matmul %24, %3, %cst_19 {dimension_numbers = #tpu.dot_dimension_numbers<[1], [0], [0], [1], [0, 0, 1, 1], [], []>} : vector<8x64xbf16>, vector<64x8xbf16>, vector<8x8xf32> -> vector<8x8xf32>
    %26 = vector.broadcast %7 : vector<1x8xf32> to vector<8x8xf32>
    %27 = arith.addf %25, %26 : vector<8x8xf32>
    %c0_20 = arith.constant 0 : index
    %c0_21 = arith.constant 0 : index
    %28 = vector.load %arg10[%c0_20, %c0_21] : memref<8x8xf32, #tpu.memory_space<vmem>>, vector<8x8xf32>
    tpu.vector_store %arg10[%c0_20, %c0_21], %27 {strides = array<i32>} : memref<8x8xf32, #tpu.memory_space<vmem>>, vector<8x8xf32>,
    return
  }
  func.func @transform_0(%arg0: i32) -> (i32, i32) {
    %c0_i32 = arith.constant 0 : i32
    %c0_i32_0 = arith.constant 0 : i32
    return %arg0, %c0_i32 : i32, i32
  }
  func.func @transform_1(%arg0: i32) -> (i32, i32) {
    %c0_i32 = arith.constant 0 : i32
    %c0_i32_0 = arith.constant 0 : i32
    %c0_i32_1 = arith.constant 0 : i32
    return %c0_i32, %c0_i32_0 : i32, i32
  }
  func.func @transform_2(%arg0: i32) -> (i32, i32) {
    %c0_i32 = arith.constant 0 : i32
    %c0_i32_0 = arith.constant 0 : i32
    %c0_i32_1 = arith.constant 0 : i32
    return %c0_i32, %c0_i32_0 : i32, i32
  }
  func.func @transform_3(%arg0: i32) -> (i32, i32) {
    %c0_i32 = arith.constant 0 : i32
    %c0_i32_0 = arith.constant 0 : i32
    %c0_i32_1 = arith.constant 0 : i32
    return %c0_i32, %c0_i32_0 : i32, i32
  }
  func.func @transform_4(%arg0: i32) -> (i32, i32) {
    %c0_i32 = arith.constant 0 : i32
    %c0_i32_0 = arith.constant 0 : i32
    %c0_i32_1 = arith.constant 0 : i32
    return %c0_i32, %c0_i32_0 : i32, i32
  }
  func.func @transform_5(%arg0: i32) -> (i32, i32) {
    %c0_i32 = arith.constant 0 : i32
    %c0_i32_0 = arith.constant 0 : i32
    %c0_i32_1 = arith.constant 0 : i32
    return %c0_i32, %c0_i32_0 : i32, i32
  }
  func.func @transform_6(%arg0: i32) -> (i32, i32) {
    %c0_i32 = arith.constant 0 : i32
    %c0_i32_0 = arith.constant 0 : i32
    %c0_i32_1 = arith.constant 0 : i32
    return %c0_i32, %c0_i32_0 : i32, i32
  }
  func.func @transform_7(%arg0: i32) -> (i32, i32) {
    %c0_i32 = arith.constant 0 : i32
    %c0_i32_0 = arith.constant 0 : i32
    %c0_i32_1 = arith.constant 0 : i32
    return %c0_i32, %c0_i32_0 : i32, i32
  }
  func.func @transform_8(%arg0: i32) -> (i32, i32) {
    %c0_i32 = arith.constant 0 : i32
    %c0_i32_0 = arith.constant 0 : i32
    %c0_i32_1 = arith.constant 0 : i32
    return %c0_i32, %c0_i32_0 : i32, i32
  }
  func.func @transform_9(%arg0: i32) -> (i32, i32) {
    %c0_i32 = arith.constant 0 : i32
    %c0_i32_0 = arith.constant 0 : i32
    return %arg0, %c0_i32 : i32, i32
  }
}

</mosaic_0001>

<llo_original>
// kernel: nn_classifier_forward.1
$region0: #{nn_classifier_forward.1}
  #allocation0 [shape = 'u32[]', space=smem, size = 0x4, offset = 0x4, fixed_abs, tag = 'smem constant byte address 0x4 - core index']
  #allocation1 [shape = 'u32[144,128]{1,0:T(1,128)}', space=vmem, size = 0x12000, scoped, tag = 'internal scratch']
  %s0 = inlined_call_operand.vmem [shape: f32[8,16], index: 0, kind: input, shape index: {}]
  %s1 = inlined_call_operand.vmem [shape: bf16[16,256], index: 1, kind: input, shape index: {}]
  %s2 = inlined_call_operand.vmem [shape: f32[1,256], index: 2, kind: input, shape index: {}]
  %s3 = inlined_call_operand.vmem [shape: bf16[256,64], index: 3, kind: input, shape index: {}]
  %s4 = inlined_call_operand.vmem [shape: f32[1,64], index: 4, kind: input, shape index: {}]
  %s5 = inlined_call_operand.vmem [shape: bf16[64,64], index: 5, kind: input, shape index: {}]
  %s6 = inlined_call_operand.vmem [shape: f32[1,64], index: 6, kind: input, shape index: {}]
  %s7 = inlined_call_operand.vmem [shape: bf16[64,8], index: 7, kind: input, shape index: {}]
  %s8 = inlined_call_operand.vmem [shape: f32[1,8], index: 8, kind: input, shape index: {}]
  %s9 = inlined_call_operand.vmem [shape: f32[8,8], index: 9, kind: output, shape index: {}]
  %s10 = sld [smem:[#allocation0]]
  $region46: #{nn_classifier_forward.1} parent=0
    _
  %s12 = ssub.s32 1, %s10
  %s13 = scalar_select 0, %s12, %s10
  // Predicated region
  $region2: #{nn_classifier_forward.1} parent=0 // pred_check
    _
  $region3: #{nn_classifier_forward.1} parent=0 // pred_check_branch
    %15 = sbr.rel (0) target = $region5
  $region4: #{nn_classifier_forward.1} parent=0 // pred_region
    _
  $region5: #{nn_classifier_forward.1} parent=0 // pred_fallthru
    _
  // Predicated region
  $region6: #{nn_classifier_forward.1} parent=0 // pred_check
    _
  $region7: #{nn_classifier_forward.1} parent=0 // pred_check_branch
    %17 = sbr.rel (0) target = $region9
  $region8: #{nn_classifier_forward.1} parent=0 // pred_region
    _
  $region9: #{nn_classifier_forward.1} parent=0 // pred_fallthru
    _
  // Predicated region
  $region10: #{nn_classifier_forward.1} parent=0 // pred_check
    _
  $region11: #{nn_classifier_forward.1} parent=0 // pred_check_branch
    %19 = sbr.rel (0) target = $region13
  $region12: #{nn_classifier_forward.1} parent=0 // pred_region
    _
  $region13: #{nn_classifier_forward.1} parent=0 // pred_fallthru
    _
  // Predicated region
  $region14: #{nn_classifier_forward.1} parent=0 // pred_check
    _
  $region15: #{nn_classifier_forward.1} parent=0 // pred_check_branch
    %21 = sbr.rel (0) target = $region17
  $region16: #{nn_classifier_forward.1} parent=0 // pred_region
    _
  $region17: #{nn_classifier_forward.1} parent=0 // pred_fallthru
    _
  // Predicated region
  $region18: #{nn_classifier_forward.1} parent=0 // pred_check
    _
  $region19: #{nn_classifier_forward.1} parent=0 // pred_check_branch
    %23 = sbr.rel (0) target = $region21
  $region20: #{nn_classifier_forward.1} parent=0 // pred_region
    _
  $region21: #{nn_classifier_forward.1} parent=0 // pred_fallthru
    _
  // Predicated region
  $region22: #{nn_classifier_forward.1} parent=0 // pred_check
    _
  $region23: #{nn_classifier_forward.1} parent=0 // pred_check_branch
    %25 = sbr.rel (0) target = $region25
  $region24: #{nn_classifier_forward.1} parent=0 // pred_region
    _
  $region25: #{nn_classifier_forward.1} parent=0 // pred_fallthru
    _
  // Predicated region
  $region26: #{nn_classifier_forward.1} parent=0 // pred_check
    _
  $region27: #{nn_classifier_forward.1} parent=0 // pred_check_branch
    %27 = sbr.rel (0) target = $region29
  $region28: #{nn_classifier_forward.1} parent=0 // pred_region
    _
  $region29: #{nn_classifier_forward.1} parent=0 // pred_fallthru
    _
  // Predicated region
  $region30: #{nn_classifier_forward.1} parent=0 // pred_check
    _
  $region31: #{nn_classifier_forward.1} parent=0 // pred_check_branch
    %29 = sbr.rel (0) target = $region33
  $region32: #{nn_classifier_forward.1} parent=0 // pred_region
    _
  $region33: #{nn_classifier_forward.1} parent=0 // pred_fallthru
    _
  // Predicated region
  $region34: #{nn_classifier_forward.1} parent=0 // pred_check
    _
  $region35: #{nn_classifier_forward.1} parent=0 // pred_check_branch
    %31 = sbr.rel (0) target = $region37
  $region36: #{nn_classifier_forward.1} parent=0 // pred_region
    _
  $region37: #{nn_classifier_forward.1} parent=0 // pred_fallthru
    _
  %v33 = vld [vmem:[%s1] sm:$0xff]
  %v34 = vld [vmem:[%s1 + $0x8] sm:$0xff]
  %v35 = vld [vmem:[%s3] sm:$0xf]
  %v36 = vld [vmem:[%s3 + $0x4] sm:$0xf]
  %v37 = vld [vmem:[%s3 + $0x8] sm:$0xf]
  %v38 = vld [vmem:[%s3 + $0xc] sm:$0xf]
  %v39 = vld [vmem:[%s3 + $0x10] sm:$0xf]
  %v40 = vld [vmem:[%s3 + $0x14] sm:$0xf]
  %v41 = vld [vmem:[%s3 + $0x18] sm:$0xf]
  %v42 = vld [vmem:[%s3 + $0x1c] sm:$0xf]
  %v43 = vld [vmem:[%s3 + $0x20] sm:$0xf]
  %v44 = vld [vmem:[%s3 + $0x24] sm:$0xf]
  %v45 = vld [vmem:[%s3 + $0x28] sm:$0xf]
  %v46 = vld [vmem:[%s3 + $0x2c] sm:$0xf]
  %v47 = vld [vmem:[%s3 + $0x30] sm:$0xf]
  %v48 = vld [vmem:[%s3 + $0x34] sm:$0xf]
  %v49 = vld [vmem:[%s3 + $0x38] sm:$0xf]
  %v50 = vld [vmem:[%s3 + $0x3c] sm:$0xf]
  %v51 = vld [vmem:[%s3 + $0x40] sm:$0xf]
  %v52 = vld [vmem:[%s3 + $0x44] sm:$0xf]
  %v53 = vld [vmem:[%s3 + $0x48] sm:$0xf]
  %v54 = vld [vmem:[%s3 + $0x4c] sm:$0xf]
  %v55 = vld [vmem:[%s3 + $0x50] sm:$0xf]
  %v56 = vld [vmem:[%s3 + $0x54] sm:$0xf]
  %v57 = vld [vmem:[%s3 + $0x58] sm:$0xf]
  %v58 = vld [vmem:[%s3 + $0x5c] sm:$0xf]
  %v59 = vld [vmem:[%s3 + $0x60] sm:$0xf]
  %v60 = vld [vmem:[%s3 + $0x64] sm:$0xf]
  %v61 = vld [vmem:[%s3 + $0x68] sm:$0xf]
  %v62 = vld [vmem:[%s3 + $0x6c] sm:$0xf]
  %v63 = vld [vmem:[%s3 + $0x70] sm:$0xf]
  %v64 = vld [vmem:[%s3 + $0x74] sm:$0xf]
  %v65 = vld [vmem:[%s3 + $0x78] sm:$0xf]
  %v66 = vld [vmem:[%s3 + $0x7c] sm:$0xf]
  %v67 = vld [vmem:[%s5] sm:$0xf]
  %v68 = vld [vmem:[%s5 + $0x4] sm:$0xf]
  %v69 = vld [vmem:[%s5 + $0x8] sm:$0xf]
  %v70 = vld [vmem:[%s5 + $0xc] sm:$0xf]
  %v71 = vld [vmem:[%s5 + $0x10] sm:$0xf]
  %v72 = vld [vmem:[%s5 + $0x14] sm:$0xf]
  %v73 = vld [vmem:[%s5 + $0x18] sm:$0xf]
  %v74 = vld [vmem:[%s5 + $0x1c] sm:$0xf]
  %v75 = vld [vmem:[%s7] sm:$0xf]
  %v76 = vld [vmem:[%s7 + $0x4] sm:$0xf]
  %v77 = vld [vmem:[%s7 + $0x8] sm:$0xf]
  %v78 = vld [vmem:[%s7 + $0xc] sm:$0xf]
  %v79 = vld [vmem:[%s7 + $0x10] sm:$0xf]
  %v80 = vld [vmem:[%s7 + $0x14] sm:$0xf]
  %v81 = vld [vmem:[%s7 + $0x18] sm:$0xf]
  %v82 = vld [vmem:[%s7 + $0x1c] sm:$0xf]
  %v83 = vld [vmem:[%s2] sm:$0x3]
  %v84 = vld [vmem:[%s4] sm:$0x1]
  %v85 = vld [vmem:[%s6] sm:$0x1]
  %v86 = vld [vmem:[%s8] sm:$0x1]
  %v87 = vld [vmem:[%s0] sm:$0xff]
  %v88 = vpack.c.bf16 %v87, %v87
  %v90 = vlaneseq
  %v91 = vshrl.u32 %v90, 7
  %v92 = vsub.s32 0, %v91
  %v93 = vrot.slane %v83, %v92
  %v94 = vlaneseq
  %v95 = vshrl.u32 %v94, 7
  %v96 = vsub.s32 1, %v95
  %v97 = vrot.slane %v83, %v96
  %v102 = vunpack.c.l.b16 %v33
  %v103 = vunpack.c.h.b16 %v33
  %v104 = vunpack.c.l.b16 %v34
  %v105 = vunpack.c.h.b16 %v34
  %v106 = vpack.c.b16 %v104, %v102
  %v107 = vpack.c.b16 %v105, %v103
  %vm110 = vcmask 130048
  %v112 = vsel %vm110, %v88, 0
  %114 = vmatprep.subr.bf16.mxu0 %v107
  %115 = vmatpush1.bf16.msra.mxu0 %v106
  %116 = vmatprep.subr.bf16.mxu0 0
  %117 = vmatpush1.bf16.msra.mxu0 0
  %118 = vmatprep.subr.bf16.mxu0 0
  %119 = vmatpush1.bf16.msra.mxu0 0
  %120 = vmatprep.subr.bf16.mxu0 0
  %121 = vmatpush1.bf16.msra.mxu0 0
  %122 = vmatprep.subr.bf16.mxu0 0
  %123 = vmatpush1.bf16.msra.mxu0 0
  %124 = vmatprep.subr.bf16.mxu0 0
  %125 = vmatpush1.bf16.msra.mxu0 0
  %126 = vmatprep.subr.bf16.mxu0 0
  %127 = vmatpush1.bf16.msra.mxu0 0
  %128 = vmatprep.subr.bf16.mxu0 0
  %129 = vmatpush1.bf16.msra.mxu0 0
  %130 = vmatprep.subr.bf16.mxu0 0
  %131 = vmatpush1.bf16.msra.mxu0 0
  %132 = vmatprep.subr.bf16.mxu0 0
  %133 = vmatpush1.bf16.msra.mxu0 0
  %134 = vmatprep.subr.bf16.mxu0 0
  %135 = vmatpush1.bf16.msra.mxu0 0
  %136 = vmatprep.subr.bf16.mxu0 0
  %137 = vmatpush1.bf16.msra.mxu0 0
  %138 = vmatprep.subr.bf16.mxu0 0
  %139 = vmatpush1.bf16.msra.mxu0 0
  %140 = vmatprep.subr.bf16.mxu0 0
  %141 = vmatpush1.bf16.msra.mxu0 0
  %142 = vmatprep.subr.bf16.mxu0 0
  %143 = vmatpush1.bf16.msra.mxu0 0
  %144 = vmatprep.subr.bf16.mxu0 0
  %145 = vmatpush1.bf16.msra.mxu0 0
  %146 = vmatprep.mubr.bf16.mxu0 0
  %147 = vmatmul.mubr.bf16.gmra.mrb[0].mxu0 %v112
  %v148 = vpop.f32.mrb[0].mxu0
  %v149 = vadd.f32 %v93, %v148
  %v150 = vpop.f32.mrb[0].mxu0
  %v151 = vadd.f32 %v97, %v150
  %v152 = vpop.f32.mrb[0].mxu0
  %v153 = vpop.f32.mrb[0].mxu0
  %154 = vdwg.mxu0
  %v155 = vpack.c.bf16 %v149, %v149
  %v156 = vpack.c.bf16 %v151, %v151
  %v157 = vtanh.bf16.pop %v155
  %v158 = vtanh.bf16.pop %v156
  %v160 = vlaneseq
  %v161 = vshrl.u32 %v160, 7
  %v162 = vsub.s32 0, %v161
  %v163 = vrot.slane %v84, %v162
  %v197 = vunpack.c.l.b16 %v35
  %v198 = vunpack.c.l.b16 %v36
  %v199 = vunpack.c.l.b16 %v37
  %v200 = vunpack.c.l.b16 %v38
  %v201 = vunpack.c.l.b16 %v39
  %v202 = vunpack.c.l.b16 %v40
  %v203 = vunpack.c.l.b16 %v41
  %v204 = vunpack.c.l.b16 %v42
  %v205 = vunpack.c.l.b16 %v43
  %v206 = vunpack.c.l.b16 %v44
  %v207 = vunpack.c.l.b16 %v45
  %v208 = vunpack.c.l.b16 %v46
  %v209 = vunpack.c.l.b16 %v47
  %v210 = vunpack.c.l.b16 %v48
  %v211 = vunpack.c.l.b16 %v49
  %v212 = vunpack.c.l.b16 %v50
  %v213 = vunpack.c.l.b16 %v51
  %v214 = vunpack.c.l.b16 %v52
  %v215 = vunpack.c.l.b16 %v53
  %v216 = vunpack.c.l.b16 %v54
  %v217 = vunpack.c.l.b16 %v55
  %v218 = vunpack.c.l.b16 %v56
  %v219 = vunpack.c.l.b16 %v57
  %v220 = vunpack.c.l.b16 %v58
  %v221 = vunpack.c.l.b16 %v59
  %v222 = vunpack.c.l.b16 %v60
  %v223 = vunpack.c.l.b16 %v61
  %v224 = vunpack.c.l.b16 %v62
  %v225 = vunpack.c.l.b16 %v63
  %v226 = vunpack.c.l.b16 %v64
  %v227 = vunpack.c.l.b16 %v65
  %v228 = vunpack.c.l.b16 %v66
  %v229 = vpack.c.b16 %v198, %v197
  %v230 = vpack.c.b16 %v200, %v199
  %v231 = vpack.c.b16 %v202, %v201
  %v232 = vpack.c.b16 %v204, %v203
  %v233 = vpack.c.b16 %v206, %v205
  %v234 = vpack.c.b16 %v208, %v207
  %v235 = vpack.c.b16 %v210, %v209
  %v236 = vpack.c.b16 %v212, %v211
  %v237 = vpack.c.b16 %v214, %v213
  %v238 = vpack.c.b16 %v216, %v215
  %v239 = vpack.c.b16 %v218, %v217
  %v240 = vpack.c.b16 %v220, %v219
  %v241 = vpack.c.b16 %v222, %v221
  %v242 = vpack.c.b16 %v224, %v223
  %v243 = vpack.c.b16 %v226, %v225
  %v244 = vpack.c.b16 %v228, %v227
  %261 = vmatprep.subr.bf16.mxu0 0
  %262 = vmatpush1.bf16.msra.mxu0 %v229
  %263 = vmatprep.subr.bf16.mxu0 0
  %264 = vmatpush1.bf16.msra.mxu0 %v230
  %265 = vmatprep.subr.bf16.mxu0 0
  %266 = vmatpush1.bf16.msra.mxu0 %v231
  %267 = vmatprep.subr.bf16.mxu0 0
  %268 = vmatpush1.bf16.msra.mxu0 %v232
  %269 = vmatprep.subr.bf16.mxu0 0
  %270 = vmatpush1.bf16.msra.mxu0 %v233
  %271 = vmatprep.subr.bf16.mxu0 0
  %272 = vmatpush1.bf16.msra.mxu0 %v234
  %273 = vmatprep.subr.bf16.mxu0 0
  %274 = vmatpush1.bf16.msra.mxu0 %v235
  %275 = vmatprep.subr.bf16.mxu0 0
  %276 = vmatpush1.bf16.msra.mxu0 %v236
  %277 = vmatprep.subr.bf16.mxu0 0
  %278 = vmatpush1.bf16.msra.mxu0 %v237
  %279 = vmatprep.subr.bf16.mxu0 0
  %280 = vmatpush1.bf16.msra.mxu0 %v238
  %281 = vmatprep.subr.bf16.mxu0 0
  %282 = vmatpush1.bf16.msra.mxu0 %v239
  %283 = vmatprep.subr.bf16.mxu0 0
  %284 = vmatpush1.bf16.msra.mxu0 %v240
  %285 = vmatprep.subr.bf16.mxu0 0
  %286 = vmatpush1.bf16.msra.mxu0 %v241
  %287 = vmatprep.subr.bf16.mxu0 0
  %288 = vmatpush1.bf16.msra.mxu0 %v242
  %289 = vmatprep.subr.bf16.mxu0 0
  %290 = vmatpush1.bf16.msra.mxu0 %v243
  %291 = vmatprep.subr.bf16.mxu0 0
  %292 = vmatpush1.bf16.msra.mxu0 %v244
  %293 = vmatprep.mubr.bf16.mxu0 %v158
  %294 = vmatmul.mubr.bf16.gmra.mrb[0].mxu0 %v157
  %v295 = vpop.f32.mrb[0].mxu0
  %v296 = vadd.f32 %v163, %v295
  %v297 = vpop.f32.mrb[0].mxu0
  %v298 = vpop.f32.mrb[0].mxu0
  %v299 = vpop.f32.mrb[0].mxu0
  %300 = vdwg.mxu0
  %v301 = vpack.c.bf16 %v296, %v296
  %v302 = vtanh.bf16.pop %v301
  %v304 = vlaneseq
  %v305 = vshrl.u32 %v304, 7
  %v306 = vsub.s32 0, %v305
  %v307 = vrot.slane %v85, %v306
  %v317 = vunpack.c.l.b16 %v67
  %v318 = vunpack.c.l.b16 %v68
  %v319 = vunpack.c.l.b16 %v69
  %v320 = vunpack.c.l.b16 %v70
  %v321 = vunpack.c.l.b16 %v71
  %v322 = vunpack.c.l.b16 %v72
  %v323 = vunpack.c.l.b16 %v73
  %v324 = vunpack.c.l.b16 %v74
  %v325 = vpack.c.b16 %v318, %v317
  %v326 = vpack.c.b16 %v320, %v319
  %v327 = vpack.c.b16 %v322, %v321
  %v328 = vpack.c.b16 %v324, %v323
  %vm333 = vcmask 523264
  %v335 = vsel %vm333, %v302, 0
  %337 = vmatprep.subr.bf16.mxu0 0
  %338 = vmatpush1.bf16.msra.mxu0 %v325
  %339 = vmatprep.subr.bf16.mxu0 0
  %340 = vmatpush1.bf16.msra.mxu0 %v326
  %341 = vmatprep.subr.bf16.mxu0 0
  %342 = vmatpush1.bf16.msra.mxu0 %v327
  %343 = vmatprep.subr.bf16.mxu0 0
  %344 = vmatpush1.bf16.msra.mxu0 %v328
  %345 = vmatprep.subr.bf16.mxu0 0
  %346 = vmatpush1.bf16.msra.mxu0 0
  %347 = vmatprep.subr.bf16.mxu0 0
  %348 = vmatpush1.bf16.msra.mxu0 0
  %349 = vmatprep.subr.bf16.mxu0 0
  %350 = vmatpush1.bf16.msra.mxu0 0
  %351 = vmatprep.subr.bf16.mxu0 0
  %352 = vmatpush1.bf16.msra.mxu0 0
  %353 = vmatprep.subr.bf16.mxu0 0
  %354 = vmatpush1.bf16.msra.mxu0 0
  %355 = vmatprep.subr.bf16.mxu0 0
  %356 = vmatpush1.bf16.msra.mxu0 0
  %357 = vmatprep.subr.bf16.mxu0 0
  %358 = vmatpush1.bf16.msra.mxu0 0
  %359 = vmatprep.subr.bf16.mxu0 0
  %360 = vmatpush1.bf16.msra.mxu0 0
  %361 = vmatprep.subr.bf16.mxu0 0
  %362 = vmatpush1.bf16.msra.mxu0 0
  %363 = vmatprep.subr.bf16.mxu0 0
  %364 = vmatpush1.bf16.msra.mxu0 0
  %365 = vmatprep.subr.bf16.mxu0 0
  %366 = vmatpush1.bf16.msra.mxu0 0
  %367 = vmatprep.subr.bf16.mxu0 0
  %368 = vmatpush1.bf16.msra.mxu0 0
  %369 = vmatprep.mubr.bf16.mxu0 0
  %370 = vmatmul.mubr.bf16.gmra.mrb[0].mxu0 %v335
  %v371 = vpop.f32.mrb[0].mxu0
  %v372 = vadd.f32 %v307, %v371
  %v373 = vpop.f32.mrb[0].mxu0
  %v374 = vpop.f32.mrb[0].mxu0
  %v375 = vpop.f32.mrb[0].mxu0
  %376 = vdwg.mxu0
  %v377 = vpack.c.bf16 %v372, %v372
  %v378 = vtanh.bf16.pop %v377
  %v380 = vlaneseq
  %v381 = vshrl.u32 %v380, 7
  %v382 = vsub.s32 0, %v381
  %v383 = vrot.slane %v86, %v382
  %v393 = vunpack.c.l.b16 %v75
  %v394 = vunpack.c.l.b16 %v76
  %v395 = vunpack.c.l.b16 %v77
  %v396 = vunpack.c.l.b16 %v78
  %v397 = vunpack.c.l.b16 %v79
  %v398 = vunpack.c.l.b16 %v80
  %v399 = vunpack.c.l.b16 %v81
  %v400 = vunpack.c.l.b16 %v82
  %v401 = vpack.c.b16 %v394, %v393
  %v402 = vpack.c.b16 %v396, %v395
  %v403 = vpack.c.b16 %v398, %v397
  %v404 = vpack.c.b16 %v400, %v399
  %v410 = vsel %vm333, %v378, 0
  %412 = vmatprep.subr.bf16.mxu0 0
  %413 = vmatpush1.bf16.msra.mxu0 %v401
  %414 = vmatprep.subr.bf16.mxu0 0
  %415 = vmatpush1.bf16.msra.mxu0 %v402
  %416 = vmatprep.subr.bf16.mxu0 0
  %417 = vmatpush1.bf16.msra.mxu0 %v403
  %418 = vmatprep.subr.bf16.mxu0 0
  %419 = vmatpush1.bf16.msra.mxu0 %v404
  %420 = vmatprep.subr.bf16.mxu0 0
  %421 = vmatpush1.bf16.msra.mxu0 0
  %422 = vmatprep.subr.bf16.mxu0 0
  %423 = vmatpush1.bf16.msra.mxu0 0
  %424 = vmatprep.subr.bf16.mxu0 0
  %425 = vmatpush1.bf16.msra.mxu0 0
  %426 = vmatprep.subr.bf16.mxu0 0
  %427 = vmatpush1.bf16.msra.mxu0 0
  %428 = vmatprep.subr.bf16.mxu0 0
  %429 = vmatpush1.bf16.msra.mxu0 0
  %430 = vmatprep.subr.bf16.mxu0 0
  %431 = vmatpush1.bf16.msra.mxu0 0
  %432 = vmatprep.subr.bf16.mxu0 0
  %433 = vmatpush1.bf16.msra.mxu0 0
  %434 = vmatprep.subr.bf16.mxu0 0
  %435 = vmatpush1.bf16.msra.mxu0 0
  %436 = vmatprep.subr.bf16.mxu0 0
  %437 = vmatpush1.bf16.msra.mxu0 0
  %438 = vmatprep.subr.bf16.mxu0 0
  %439 = vmatpush1.bf16.msra.mxu0 0
  %440 = vmatprep.subr.bf16.mxu0 0
  %441 = vmatpush1.bf16.msra.mxu0 0
  %442 = vmatprep.subr.bf16.mxu0 0
  %443 = vmatpush1.bf16.msra.mxu0 0
  %444 = vmatprep.mubr.bf16.mxu0 0
  %445 = vmatmul.mubr.bf16.gmra.mrb[0].mxu0 %v410
  %v446 = vpop.f32.mrb[0].mxu0
  %v447 = vadd.f32 %v383, %v446
  %v448 = vpop.f32.mrb[0].mxu0
  %v449 = vpop.f32.mrb[0].mxu0
  %v450 = vpop.f32.mrb[0].mxu0
  %451 = vdwg.mxu0
  %vm452 = vcmask 64512
  %453 = vst.msk [vmem:[%s9] sm:$0xff] %vm452, %v447
  // Predicated region
  $region38: #{nn_classifier_forward.1} parent=0 // pred_check
    _
  $region39: #{nn_classifier_forward.1} parent=0 // pred_check_branch
    %455 = sbr.rel (0) target = $region41
  $region40: #{nn_classifier_forward.1} parent=0 // pred_region
    _
  $region41: #{nn_classifier_forward.1} parent=0 // pred_fallthru
    _
  // Predicated region
  $region42: #{nn_classifier_forward.1} parent=0 // pred_check
    _
  $region43: #{nn_classifier_forward.1} parent=0 // pred_check_branch
    %457 = sbr.rel (0) target = $region45
  $region44: #{nn_classifier_forward.1} parent=0 // pred_region
    _
  $region45: #{nn_classifier_forward.1} parent=0 // pred_fallthru
    _

</llo_original>
